<compile_context>
chip_gen: v7x
topology: tpu7x:2x2x1
jax: 0.10.0
libtpu: 0.0.40
codegen_flags: <defaults>
</compile_context>

<pallas_src>
import functools

import jax
import jax.numpy as jnp
from jax.experimental import pallas as pl
from jax.experimental.pallas import tpu as pltpu

LANE = 128     # lane width for channel / output / im2col-K padding


def _round_up(x, m):
    return (x + m - 1) // m * m


def _choose_b_tile(B, S_pad, E, c_pad, k_pad, target_m=1024):
    """Pick the batch tile per the perf review:
      * M = bt*S_pad >= ~target_m so the merged matmul dominates per-step
        overhead (v5e, with the slowest MXU, benefits most from large M).
      * per-step working set stays well under v7x's 64 MiB VMEM.
      * tiny batches are not over-padded; large batches keep >= 2 grid steps
        so the "parallel" batch axis can shard across v7x's two TensorCores.
    """
    def step_bytes(bt):
        n = bt * S_pad
        return (2 * n * E * 2          # x block, double-buffered bf16
                + n * 4 * E            # f32 tap view for the rolls
                + n * 2 * k_pad        # im2col slab scratch (bf16)
                + n * 4 * c_pad)       # conv accumulator / masked acc (f32)

    B8 = _round_up(max(B, 1), 8)
    bt = _round_up(-(-target_m // S_pad), 8)        # ceil + 8-align
    while bt > 8 and step_bytes(bt) > 20 * 2**20:   # VMEM cap (v7x-safe)
        bt -= 8
    bt = min(bt, B8)                                # don't over-pad tiny batches
    if B8 <= bt and B8 >= 16 and (B8 // 2) * S_pad >= 512:
        bt = _round_up(-(-B8 // 2), 8)              # >= 2 steps for v7x megacore
    return max(bt, 8)


def text_cnn_kernel(x_ref, wc_ref, bc_ref, mask_ref, fcw_ref, fcb_ref, o_ref,
                    slab_ref, *, kmax):
    """Fused TextCNN for one batch tile:
    im2col (rolls written in place into a lane-dense slab) -> single merged
    conv matmul -> bias + ReLU -> masked global max-pool -> FC, written to a
    lane-dense (B_tile, O_pad) output block."""
    Bt, S_pad, E = x_ref.shape
    N = Bt * S_pad
    K = kmax * E
    K_pad = slab_ref.shape[-1]

    # f32 view for the XLU sublane rolls (32-bit rotates; v5e has no bf16
    # VPU).  Each tap is cast to bf16 and stored directly into its lane slice
    # of the lane-dense (N, K_pad) slab, so at most one extra tap copy is
    # ever live (no kmax-wide lane concat -> lower vreg/VMEM pressure).
    xf = x_ref[...].astype(jnp.float32).reshape(N, E)
    slab_ref[:, 0:E] = xf.astype(jnp.bfloat16)
    for j in range(1, kmax):
        tap = pltpu.roll(xf, shift=N - j, axis=0)
        slab_ref[:, j * E:(j + 1) * E] = tap.astype(jnp.bfloat16)
    if K_pad > K:
        # K-padding lanes must be zero (their w_conv rows are zero, but
        # uninitialized VMEM could hold NaNs).  Re-zeroed every step so the
        # kernel stays correct when the parallel grid is split across cores.
        slab_ref[:, K:] = jnp.zeros((N, K_pad - K), jnp.bfloat16)

    # One merged MXU matmul: all taps of all branches. (N,K_pad)@(K_pad,C_pad)
    acc = jnp.dot(slab_ref[...], wc_ref[...],
                  preferred_element_type=jnp.float32)            # (N, C_pad) f32
    acc = jnp.maximum(acc + bc_ref[...], 0.0)                    # bias + ReLU

    # Masked global max-pool.  mask is a precomputed (S_pad, C_pad) {0,1} f32
    # slab (hoisted out of the kernel; no per-step iota/compare); multiplying
    # ReLU outputs (>= 0) by 0 never beats the per-branch max.
    C_pad = acc.shape[-1]
    acc = acc.reshape(Bt, S_pad, C_pad) * mask_ref[...]
    pooled = jnp.max(acc, axis=1)                                # (Bt, C_pad)

    # Dropout(p=0.5): eval-mode identity (matches inference forward semantics).
    # TODO(synk): training-mode stochastic dropout (pltpu.prng_*) not emitted.

    out = jnp.dot(pooled.astype(jnp.bfloat16), fcw_ref[...],
                  preferred_element_type=jnp.float32)            # (Bt, O_pad)
    o_ref[...] = out + fcb_ref[...]                              # lane-dense store


def text_cnn_forward(tokens, params, kernel_sizes):
    """tokens: (seq_len, batch) int32 ids, mirroring the PyTorch input."""
    emb = params["embedding"]                        # (vocab, E)
    V, E = emb.shape
    S, B = tokens.shape
    kmax = max(kernel_sizes)
    C = params["conv0_w"].shape[-1]
    nC = len(kernel_sizes) * C
    O = params["fc_w"].shape[-1]

    S_pad = _round_up(S + kmax - 1, 8)               # room for kmax taps, 8-aligned
    C_pad = _round_up(nC, LANE)
    O_pad = _round_up(O, LANE)
    K_pad = _round_up(kmax * E, LANE)                # lane-dense im2col K

    bt = _choose_b_tile(B, S_pad, E, C_pad, K_pad)
    B_pad = _round_up(_round_up(B, 8), bt)
    grid = B_pad // bt

    # Embedding gather with padding folded in: bf16 table + one all-zero row;
    # only the tiny (S,B) int32 id matrix is transposed/padded, then a single
    # gather emits the padded bf16 (B_pad, S_pad, E) activation slab directly.
    # TODO(synk): the gather could move in-kernel via
    # PrefetchScalarGridSpec(num_scalar_prefetch=1) token ids + VMEM table.
    emb_bf = jnp.concatenate(
        [emb.astype(jnp.bfloat16), jnp.zeros((1, E), jnp.bfloat16)], axis=0)
    pad_id = V                                       # index of the zero row
    ids = jnp.pad(jnp.transpose(tokens), ((0, B_pad - B), (0, S_pad - S)),
                  constant_values=pad_id)
    x = jnp.take(emb_bf, ids, axis=0)                # (B_pad, S_pad, E) bf16

    # Merge conv branches: pad each branch to kmax taps, concat along output
    # channels (padded to a 128 multiple) and pad K rows to K_pad (zero rows
    # so the slab's padding lanes contribute nothing).
    w_parts, b_parts, thr_parts = [], [], []
    for i, k in enumerate(kernel_sizes):
        w = params[f"conv{i}_w"]                     # (k, E, C)
        w_parts.append(jnp.pad(w, ((0, kmax - k), (0, 0), (0, 0))))
        b_parts.append(params[f"conv{i}_b"].reshape(-1))
        thr_parts.append(jnp.full((C,), S - k, jnp.int32))
    w_conv = jnp.concatenate(w_parts, axis=-1)       # (kmax, E, nC)
    w_conv = jnp.pad(w_conv, ((0, 0), (0, 0), (0, C_pad - nC)))
    w_conv = w_conv.reshape(kmax * E, C_pad)
    w_conv = jnp.pad(w_conv, ((0, K_pad - kmax * E), (0, 0))).astype(jnp.bfloat16)
    b_conv = jnp.pad(jnp.concatenate(b_parts), (0, C_pad - nC))
    b_conv = b_conv.reshape(1, C_pad).astype(jnp.float32)

    # Validity mask hoisted out of the kernel: position p is valid for a
    # branch of width k iff p <= S - k; padded channels are fully masked.
    thr = jnp.pad(jnp.concatenate(thr_parts), (0, C_pad - nC),
                  constant_values=-1)
    mask = (jnp.arange(S_pad)[:, None] <= thr[None, :]).astype(jnp.float32)

    # FC weight padded with zero rows/cols so padded conv channels and padded
    # output lanes contribute nothing; output is written lane-dense.
    fc_w = jnp.pad(params["fc_w"], ((0, C_pad - nC), (0, O_pad - O)))
    fc_w = fc_w.astype(jnp.bfloat16)
    fc_b = jnp.pad(params["fc_b"].reshape(1, O), ((0, 0), (0, O_pad - O)))
    fc_b = fc_b.astype(jnp.float32)

    # Explicit VMEM budget (review item): per-step blocks (double-buffered) +
    # scratch slab + f32 temps, with headroom; capped safely under v7x's
    # 64 MiB physical VMEM.
    n = bt * S_pad
    step_bytes = (
        2 * n * E * 2                                        # x block x2 (bf16)
        + 2 * (K_pad * C_pad * 2 + C_pad * 4 + S_pad * C_pad * 4
               + C_pad * O_pad * 2 + O_pad * 4)              # invariant operands x2
        + 2 * bt * O_pad * 4                                 # out block x2
        + n * K_pad * 2                                      # slab scratch (bf16)
        + n * (4 * E + 4 * C_pad))                           # f32 tap + conv acc
    vmem_limit = int(min(48 * 2**20, max(32 * 2**20, 2 * step_bytes)))

    flops = 2 * B_pad * S_pad * K_pad * C_pad + 2 * B_pad * C_pad * O_pad
    bytes_accessed = (B_pad * S_pad * E * 2
                      + K_pad * C_pad * 2 + C_pad * 4
                      + S_pad * C_pad * 4
                      + C_pad * O_pad * 2 + O_pad * 4
                      + B_pad * O_pad * 4)

    kernel = functools.partial(text_cnn_kernel, kmax=kmax)
    out = pl.pallas_call(
        kernel,
        out_shape=jax.ShapeDtypeStruct((B_pad, O_pad), jnp.float32),
        grid_spec=pltpu.PrefetchScalarGridSpec(
            num_scalar_prefetch=0,
            grid=(grid,),
            in_specs=[
                pl.BlockSpec((bt, S_pad, E), lambda b: (b, 0, 0)),
                # Constant index_maps: weights/bias/mask are DMA'd once and
                # stay resident; Pallas skips re-fetch on unchanged blocks.
                pl.BlockSpec((K_pad, C_pad), lambda b: (0, 0)),
                pl.BlockSpec((1, C_pad), lambda b: (0, 0)),
                pl.BlockSpec((S_pad, C_pad), lambda b: (0, 0)),
                pl.BlockSpec((C_pad, O_pad), lambda b: (0, 0)),
                pl.BlockSpec((1, O_pad), lambda b: (0, 0)),
            ],
            out_specs=pl.BlockSpec((bt, O_pad), lambda b: (b, 0)),
            scratch_shapes=[pltpu.VMEM((bt * S_pad, K_pad), jnp.bfloat16)],
        ),
        compiler_params=pltpu.CompilerParams(
            dimension_semantics=("parallel",),
            vmem_limit_bytes=vmem_limit),
        cost_estimate=pl.CostEstimate(
            flops=flops, transcendentals=0, bytes_accessed=bytes_accessed),
    )(x, w_conv, b_conv, mask, fc_w, fc_b)

    return out[:B, :O]


def init_params(key, vocab_size, embedding_dim, kernel_sizes, kernel_num,
                output_dim):
    """Deterministic synthetic parameters (shapes match the nn.Module)."""
    n_keys = 1 + 2 * len(kernel_sizes) + 2
    keys = jax.random.split(key, n_keys)
    params = {}
    params["embedding"] = (
        jax.random.normal(keys[0], (vocab_size, embedding_dim), jnp.float32) * 0.1)
    for i, k in enumerate(kernel_sizes):
        # PyTorch Conv2d weight is (C, 1, k, E); stored here as (k, E, C).
        params[f"conv{i}_w"] = (
            jax.random.normal(keys[1 + 2 * i],
                              (k, embedding_dim, kernel_num), jnp.float32) * 0.1)
        params[f"conv{i}_b"] = (
            jax.random.normal(keys[2 + 2 * i], (1, kernel_num), jnp.float32) * 0.1)
    # PyTorch Linear weight is (O, 3C); stored pre-transposed as (3C, O).
    params["fc_w"] = (
        jax.random.normal(keys[-2],
                          (len(kernel_sizes) * kernel_num, output_dim),
                          jnp.float32) * 0.1)
    params["fc_b"] = (
        jax.random.normal(keys[-1], (1, output_dim), jnp.float32) * 0.1)
    return params


if __name__ == "__main__":
    VOCAB = 50
    EMB = 32
    KERNEL_SIZES = (3, 4, 5)
    KERNEL_NUM = 8
    OUTPUT_DIM = 4
    SEQ = 16
    BATCH = 2

    root = jax.random.PRNGKey(0)
    k_params, k_tokens = jax.random.split(root)

    params = init_params(k_params, VOCAB, EMB, KERNEL_SIZES, KERNEL_NUM,
                         OUTPUT_DIM)
    # PyTorch forward expects (seq_len, batch) integer token ids.
    tokens = jax.random.randint(k_tokens, (SEQ, BATCH), 0, VOCAB,
                                dtype=jnp.int32)

    out = text_cnn_forward(tokens, params, KERNEL_SIZES)
    jax.block_until_ready(out)
    assert out.shape == (BATCH, OUTPUT_DIM)
    print("KERNEL_OK")
</pallas_src>

<mosaic_0001>
module attributes {stable_mosaic.version = 11 : i64} {
  func.func @text_cnn_kernel(%arg0: i32, %arg1: memref<8x24x32xbf16, #tpu.memory_space<vmem>>, %arg2: memref<256x128xbf16, #tpu.memory_space<vmem>>, %arg3: memref<1x128xf32, #tpu.memory_space<vmem>>, %arg4: memref<24x128xf32, #tpu.memory_space<vmem>>, %arg5: memref<128x128xbf16, #tpu.memory_space<vmem>>, %arg6: memref<1x128xf32, #tpu.memory_space<vmem>>, %arg7: memref<8x128xf32, #tpu.memory_space<vmem>>, %arg8: memref<192x256xbf16, #tpu.memory_space<vmem>>) attributes {dimension_semantics = [#tpu.dimension_semantics<parallel>], iteration_bounds = array<i64: 1>, scalar_prefetch = 0 : i64, scratch_operands = 1 : i64, tpu.core_type = #tpu.core_type<tc>, window_params = [{transform_indices = @transform_0, window_bounds = array<i64: 8, 24, 32>}, {pipeline_mode = #tpu.pipeline_mode<synchronous>, transform_indices = @transform_1, window_bounds = array<i64: 256, 128>}, {pipeline_mode = #tpu.pipeline_mode<synchronous>, transform_indices = @transform_2, window_bounds = array<i64: 1, 128>}, {pipeline_mode = #tpu.pipeline_mode<synchronous>, transform_indices = @transform_3, window_bounds = array<i64: 24, 128>}, {pipeline_mode = #tpu.pipeline_mode<synchronous>, transform_indices = @transform_4, window_bounds = array<i64: 128, 128>}, {pipeline_mode = #tpu.pipeline_mode<synchronous>, transform_indices = @transform_5, window_bounds = array<i64: 1, 128>}, {transform_indices = @transform_6, window_bounds = array<i64: 8, 128>}]} {
    %c0 = arith.constant 0 : index
    %c0_0 = arith.constant 0 : index
    %c0_1 = arith.constant 0 : index
    %0 = vector.load %arg1[%c0, %c0_0, %c0_1] : memref<8x24x32xbf16, #tpu.memory_space<vmem>>, vector<8x24x32xbf16>
    %1 = arith.extf %0 : vector<8x24x32xbf16> to vector<8x24x32xf32>
    %2 = vector.shape_cast %1 : vector<8x24x32xf32> to vector<192x32xf32>
    %3 = arith.truncf %2 : vector<192x32xf32> to vector<192x32xbf16>
    %c0_2 = arith.constant 0 : index
    %c0_3 = arith.constant 0 : index
    %4 = vector.load %arg8[%c0_2, %c0_3] : memref<192x256xbf16, #tpu.memory_space<vmem>>, vector<192x32xbf16>
    tpu.vector_store %arg8[%c0_2, %c0_3], %3 {strides = array<i32>} : memref<192x256xbf16, #tpu.memory_space<vmem>>, vector<192x32xbf16>,
    %c191_i32 = arith.constant 191 : i32
    %5 = tpu.dynamic_rotate %2 by %c191_i32 dim 0 : vector<192x32xf32>, i32 -> vector<192x32xf32>
    %6 = arith.truncf %5 : vector<192x32xf32> to vector<192x32xbf16>
    %c0_4 = arith.constant 0 : index
    %c32 = arith.constant 32 : index
    %7 = vector.load %arg8[%c0_4, %c32] : memref<192x256xbf16, #tpu.memory_space<vmem>>, vector<192x32xbf16>
    tpu.vector_store %arg8[%c0_4, %c32], %6 {strides = array<i32>} : memref<192x256xbf16, #tpu.memory_space<vmem>>, vector<192x32xbf16>,
    %c190_i32 = arith.constant 190 : i32
    %8 = tpu.dynamic_rotate %2 by %c190_i32 dim 0 : vector<192x32xf32>, i32 -> vector<192x32xf32>
    %9 = arith.truncf %8 : vector<192x32xf32> to vector<192x32xbf16>
    %c0_5 = arith.constant 0 : index
    %c64 = arith.constant 64 : index
    %10 = vector.load %arg8[%c0_5, %c64] : memref<192x256xbf16, #tpu.memory_space<vmem>>, vector<192x32xbf16>
    tpu.vector_store %arg8[%c0_5, %c64], %9 {strides = array<i32>} : memref<192x256xbf16, #tpu.memory_space<vmem>>, vector<192x32xbf16>,
    %c189_i32 = arith.constant 189 : i32
    %11 = tpu.dynamic_rotate %2 by %c189_i32 dim 0 : vector<192x32xf32>, i32 -> vector<192x32xf32>
    %12 = arith.truncf %11 : vector<192x32xf32> to vector<192x32xbf16>
    %c0_6 = arith.constant 0 : index
    %c96 = arith.constant 96 : index
    %13 = vector.load %arg8[%c0_6, %c96] : memref<192x256xbf16, #tpu.memory_space<vmem>>, vector<192x32xbf16>
    tpu.vector_store %arg8[%c0_6, %c96], %12 {strides = array<i32>} : memref<192x256xbf16, #tpu.memory_space<vmem>>, vector<192x32xbf16>,
    %c188_i32 = arith.constant 188 : i32
    %14 = tpu.dynamic_rotate %2 by %c188_i32 dim 0 : vector<192x32xf32>, i32 -> vector<192x32xf32>
    %15 = arith.truncf %14 : vector<192x32xf32> to vector<192x32xbf16>
    %c0_7 = arith.constant 0 : index
    %c128 = arith.constant 128 : index
    %16 = vector.load %arg8[%c0_7, %c128] : memref<192x256xbf16, #tpu.memory_space<vmem>>, vector<192x32xbf16>
    tpu.vector_store %arg8[%c0_7, %c128], %15 {strides = array<i32>} : memref<192x256xbf16, #tpu.memory_space<vmem>>, vector<192x32xbf16>,
    %cst = arith.constant 0.000000e+00 : bf16
    %17 = vector.broadcast %cst : bf16 to vector<192x96xbf16>
    %c0_8 = arith.constant 0 : index
    %c160 = arith.constant 160 : index
    %18 = vector.load %arg8[%c0_8, %c160] : memref<192x256xbf16, #tpu.memory_space<vmem>>, vector<192x96xbf16>
    tpu.vector_store %arg8[%c0_8, %c160], %17 {strides = array<i32>} : memref<192x256xbf16, #tpu.memory_space<vmem>>, vector<192x96xbf16>,
    %c0_9 = arith.constant 0 : index
    %c0_10 = arith.constant 0 : index
    %19 = vector.load %arg8[%c0_9, %c0_10] : memref<192x256xbf16, #tpu.memory_space<vmem>>, vector<192x256xbf16>
    %c0_11 = arith.constant 0 : index
    %c0_12 = arith.constant 0 : index
    %20 = vector.load %arg2[%c0_11, %c0_12] : memref<256x128xbf16, #tpu.memory_space<vmem>>, vector<256x128xbf16>
    %cst_13 = arith.constant dense<0.000000e+00> : vector<192x128xf32>
    %21 = tpu.matmul %19, %20, %cst_13 {dimension_numbers = #tpu.dot_dimension_numbers<[1], [0], [0], [1], [0, 0, 1, 1], [], []>} : vector<192x256xbf16>, vector<256x128xbf16>, vector<192x128xf32> -> vector<192x128xf32>
    %c0_14 = arith.constant 0 : index
    %c0_15 = arith.constant 0 : index
    %22 = vector.load %arg3[%c0_14, %c0_15] : memref<1x128xf32, #tpu.memory_space<vmem>>, vector<1x128xf32>
    %23 = vector.broadcast %22 : vector<1x128xf32> to vector<192x128xf32>
    %24 = arith.addf %21, %23 : vector<192x128xf32>
    %cst_16 = arith.constant 0.000000e+00 : f32
    %25 = vector.broadcast %cst_16 : f32 to vector<192x128xf32>
    %26 = arith.maximumf %24, %25 : vector<192x128xf32>
    %27 = vector.shape_cast %26 : vector<192x128xf32> to vector<8x24x128xf32>
    %c0_17 = arith.constant 0 : index
    %c0_18 = arith.constant 0 : index
    %28 = vector.load %arg4[%c0_17, %c0_18] : memref<24x128xf32, #tpu.memory_space<vmem>>, vector<24x128xf32>
    %29 = vector.shape_cast %28 : vector<24x128xf32> to vector<1x24x128xf32>
    %30 = vector.broadcast %29 : vector<1x24x128xf32> to vector<8x24x128xf32>
    %31 = arith.mulf %27, %30 : vector<8x24x128xf32>
    %cst_19 = arith.constant dense<0xFF800000> : vector<8x128xf32>
    %32 = vector.multi_reduction <maximumf>, %31, %cst_19 [1] : vector<8x24x128xf32> to vector<8x128xf32>
    %33 = arith.truncf %32 : vector<8x128xf32> to vector<8x128xbf16>
    %c0_20 = arith.constant 0 : index
    %c0_21 = arith.constant 0 : index
    %34 = vector.load %arg5[%c0_20, %c0_21] : memref<128x128xbf16, #tpu.memory_space<vmem>>, vector<128x128xbf16>
    %cst_22 = arith.constant dense<0.000000e+00> : vector<8x128xf32>
    %35 = tpu.matmul %33, %34, %cst_22 {dimension_numbers = #tpu.dot_dimension_numbers<[1], [0], [0], [1], [0, 0, 1, 1], [], []>} : vector<8x128xbf16>, vector<128x128xbf16>, vector<8x128xf32> -> vector<8x128xf32>
    %c0_23 = arith.constant 0 : index
    %c0_24 = arith.constant 0 : index
    %36 = vector.load %arg6[%c0_23, %c0_24] : memref<1x128xf32, #tpu.memory_space<vmem>>, vector<1x128xf32>
    %37 = vector.broadcast %36 : vector<1x128xf32> to vector<8x128xf32>
    %38 = arith.addf %35, %37 : vector<8x128xf32>
    %c0_25 = arith.constant 0 : index
    %c0_26 = arith.constant 0 : index
    %39 = vector.load %arg7[%c0_25, %c0_26] : memref<8x128xf32, #tpu.memory_space<vmem>>, vector<8x128xf32>
    tpu.vector_store %arg7[%c0_25, %c0_26], %38 {strides = array<i32>} : memref<8x128xf32, #tpu.memory_space<vmem>>, vector<8x128xf32>,
    return
  }
  func.func @transform_0(%arg0: i32) -> (i32, i32, i32) {
    %c0_i32 = arith.constant 0 : i32
    %c0_i32_0 = arith.constant 0 : i32
    %c0_i32_1 = arith.constant 0 : i32
    return %arg0, %c0_i32, %c0_i32_0 : i32, i32, i32
  }
  func.func @transform_1(%arg0: i32) -> (i32, i32) {
    %c0_i32 = arith.constant 0 : i32
    %c0_i32_0 = arith.constant 0 : i32
    %c0_i32_1 = arith.constant 0 : i32
    return %c0_i32, %c0_i32_0 : i32, i32
  }
  func.func @transform_2(%arg0: i32) -> (i32, i32) {
    %c0_i32 = arith.constant 0 : i32
    %c0_i32_0 = arith.constant 0 : i32
    %c0_i32_1 = arith.constant 0 : i32
    return %c0_i32, %c0_i32_0 : i32, i32
  }
  func.func @transform_3(%arg0: i32) -> (i32, i32) {
    %c0_i32 = arith.constant 0 : i32
    %c0_i32_0 = arith.constant 0 : i32
    %c0_i32_1 = arith.constant 0 : i32
    return %c0_i32, %c0_i32_0 : i32, i32
  }
  func.func @transform_4(%arg0: i32) -> (i32, i32) {
    %c0_i32 = arith.constant 0 : i32
    %c0_i32_0 = arith.constant 0 : i32
    %c0_i32_1 = arith.constant 0 : i32
    return %c0_i32, %c0_i32_0 : i32, i32
  }
  func.func @transform_5(%arg0: i32) -> (i32, i32) {
    %c0_i32 = arith.constant 0 : i32
    %c0_i32_0 = arith.constant 0 : i32
    %c0_i32_1 = arith.constant 0 : i32
    return %c0_i32, %c0_i32_0 : i32, i32
  }
  func.func @transform_6(%arg0: i32) -> (i32, i32) {
    %c0_i32 = arith.constant 0 : i32
    %c0_i32_0 = arith.constant 0 : i32
    return %arg0, %c0_i32 : i32, i32
  }
}

</mosaic_0001>

<llo_original>
// kernel: tpu_custom_call.1
$region0: #{tpu_custom_call.1}
  #allocation0 [shape = 'u32[]', space=smem, size = 0x4, offset = 0x4, fixed_abs, tag = 'smem constant byte address 0x4 - core index']
  #allocation1 [shape = 'u32[144,128]{1,0:T(1,128)}', space=vmem, size = 0x12000, scoped, tag = 'internal scratch']
  #allocation2 [shape = 'bf16[192,256]{1,0:T(16,128)(2,1)}', space=vmem, size = 0x18000, scoped, tag = 'scratch operand']
  %s0 = inlined_call_operand.hbm [shape: bf16[8,24,32], index: 0, kind: input, shape index: {}]
  %s1 = inlined_call_operand.hbm [shape: bf16[256,128], index: 1, kind: input, shape index: {}]
  %s2 = inlined_call_operand.vmem [shape: f32[1,128], index: 2, kind: input, shape index: {}]
  %s3 = inlined_call_operand.hbm [shape: f32[24,128], index: 3, kind: input, shape index: {}]
  %s4 = inlined_call_operand.hbm [shape: bf16[128,128], index: 4, kind: input, shape index: {}]
  %s5 = inlined_call_operand.vmem [shape: f32[1,128], index: 5, kind: input, shape index: {}]
  %s6 = inlined_call_operand.hbm [shape: f32[8,128], index: 6, kind: output, shape index: {}]
  %s7 = sld [smem:[#allocation0]]
  $region50: #{tpu_custom_call.1} parent=0
    _
  %s9 = ssub.s32 1, %s7
  %s10 = scalar_select 0, %s9, %s7
  $region1: #{tpu_custom_call.1} parent=0
    #allocation3 [shape = 'u8[49152]{0}', space=vmem, size = 0xc000, scoped, tag = 'input window, operand 0, single buffered']
    #allocation4 [shape = 's32[1]{0}', space=sflag, size = 0x4, scoped, tag = 'scoped memory for tpu_custom_call.1']
    #allocation5 [shape = 's32[1]{0}', space=sflag, size = 0x4, scoped, tag = 'scoped memory for tpu_custom_call.1']
    #allocation6 [shape = 'u8[65536]{0}', space=vmem, size = 0x10000, scoped, tag = 'input window, operand 1, single buffered']
    #allocation7 [shape = 's32[1]{0}', space=sflag, size = 0x4, scoped, tag = 'scoped memory for tpu_custom_call.1']
    #allocation8 [shape = 'u8[12288]{0}', space=vmem, size = 0x3000, scoped, tag = 'input window, operand 3, single buffered']
    #allocation9 [shape = 'u8[32768]{0}', space=vmem, size = 0x8000, scoped, tag = 'input window, operand 4, single buffered']
    #allocation10 [shape = 's32[1]{0}', space=sflag, size = 0x4, scoped, tag = 'scoped memory for tpu_custom_call.1']
    #allocation11 [shape = 'u8[4096]{0}', space=vmem, size = 0x1000, scoped, tag = 'output window, operand 0, single buffered']
    %11 = vsyncpa [#allocation4], 0
    %12 = vsyncpa [#allocation7], 0
    %13 = vsyncpa [#allocation10], 0
    %14 = vsyncpa [#allocation5], 0
    // Predicated region
    $region2: #{tpu_custom_call.1} parent=1 // pred_check
      _
    $region3: #{tpu_custom_call.1} parent=1 // pred_check_branch
      %16 = sbr.rel (0) target = $region5
    $region4: #{tpu_custom_call.1} parent=1 // pred_region
      %s18 = ssub.s32 1536, 1536
      %19 = vsyncadd [#allocation4], %s18
      %s20 = sshll.u32 [#allocation3], 4
      %s21 = int_to_ptr.vmem [resolvable:$true] %s20
      %26 = dma.hbm_to_vmem [thread:$0]  %s0, 1536, %s21, [#allocation4], 64, 64, 4
    $region5: #{tpu_custom_call.1} parent=1 // pred_fallthru
      _
    // Predicated region
    $region6: #{tpu_custom_call.1} parent=1 // pred_check
      _
    $region7: #{tpu_custom_call.1} parent=1 // pred_check_branch
      %28 = sbr.rel (0) target = $region9
    $region8: #{tpu_custom_call.1} parent=1 // pred_region
      %s30 = ssub.s32 2048, 2048
      %31 = vsyncadd [#allocation7], %s30
      %s32 = sshll.u32 [#allocation6], 4
      %s33 = int_to_ptr.vmem [resolvable:$true] %s32
      %38 = dma.hbm_to_vmem [thread:$0]  %s1, 2048, %s33, [#allocation7], 64, 64, 4
    $region9: #{tpu_custom_call.1} parent=1 // pred_fallthru
      _
    // Predicated region
    $region10: #{tpu_custom_call.1} parent=1 // pred_check
      _
    $region11: #{tpu_custom_call.1} parent=1 // pred_check_branch
      %40 = sbr.rel (0) target = $region13
    $region12: #{tpu_custom_call.1} parent=1 // pred_region
      _
    $region13: #{tpu_custom_call.1} parent=1 // pred_fallthru
      _
    // Predicated region
    $region14: #{tpu_custom_call.1} parent=1 // pred_check
      _
    $region15: #{tpu_custom_call.1} parent=1 // pred_check_branch
      %42 = sbr.rel (0) target = $region17
    $region16: #{tpu_custom_call.1} parent=1 // pred_region
      %s44 = ssub.s32 384, 384
      %45 = vsyncadd [#allocation7], %s44
      %s46 = sshll.u32 [#allocation8], 4
      %s47 = int_to_ptr.vmem [resolvable:$true] %s46
      %52 = dma.hbm_to_vmem [thread:$0]  %s3, 384, %s47, [#allocation7], 128, 128, 8
    $region17: #{tpu_custom_call.1} parent=1 // pred_fallthru
      _
    // Predicated region
    $region18: #{tpu_custom_call.1} parent=1 // pred_check
      _
    $region19: #{tpu_custom_call.1} parent=1 // pred_check_branch
      %54 = sbr.rel (0) target = $region21
    $region20: #{tpu_custom_call.1} parent=1 // pred_region
      %s56 = ssub.s32 1024, 1024
      %57 = vsyncadd [#allocation10], %s56
      %s58 = sshll.u32 [#allocation9], 4
      %s59 = int_to_ptr.vmem [resolvable:$true] %s58
      %64 = dma.hbm_to_vmem [thread:$0]  %s4, 1024, %s59, [#allocation10], 64, 64, 4
    $region21: #{tpu_custom_call.1} parent=1 // pred_fallthru
      _
    // Predicated region
    $region22: #{tpu_custom_call.1} parent=1 // pred_check
      _
    $region23: #{tpu_custom_call.1} parent=1 // pred_check_branch
      %66 = sbr.rel (0) target = $region25
    $region24: #{tpu_custom_call.1} parent=1 // pred_region
      _
    $region25: #{tpu_custom_call.1} parent=1 // pred_fallthru
      _
    // Predicated region
    $region26: #{tpu_custom_call.1} parent=1 // pred_check
      _
    $region27: #{tpu_custom_call.1} parent=1 // pred_check_branch
      %68 = sbr.rel (0) target = $region29
    $region28: #{tpu_custom_call.1} parent=1 // pred_region
      %69 = dma.done [#allocation4], 1536
    $region29: #{tpu_custom_call.1} parent=1 // pred_fallthru
      _
    // Predicated region
    $region30: #{tpu_custom_call.1} parent=1 // pred_check
      _
    $region31: #{tpu_custom_call.1} parent=1 // pred_check_branch
      %71 = sbr.rel (0) target = $region33
    $region32: #{tpu_custom_call.1} parent=1 // pred_region
      %72 = dma.done [#allocation7], 2048
    $region33: #{tpu_custom_call.1} parent=1 // pred_fallthru
      _
    // Predicated region
    $region34: #{tpu_custom_call.1} parent=1 // pred_check
      _
    $region35: #{tpu_custom_call.1} parent=1 // pred_check_branch
      %74 = sbr.rel (0) target = $region37
    $region36: #{tpu_custom_call.1} parent=1 // pred_region
      %75 = dma.done [#allocation7], 384
    $region37: #{tpu_custom_call.1} parent=1 // pred_fallthru
      _
    // Predicated region
    $region38: #{tpu_custom_call.1} parent=1 // pred_check
      _
    $region39: #{tpu_custom_call.1} parent=1 // pred_check_branch
      %77 = sbr.rel (0) target = $region41
    $region40: #{tpu_custom_call.1} parent=1 // pred_region
      %78 = dma.done [#allocation10], 1024
    $region41: #{tpu_custom_call.1} parent=1 // pred_fallthru
      _
    %v80 = vld [vmem:[#allocation3] sm:$0xf]
    %v81 = vld [vmem:[#allocation3 + $0x4] sm:$0xf]
    %v82 = vld [vmem:[#allocation3 + $0x8] sm:$0xf]
    %v83 = vld [vmem:[#allocation3 + $0xc] sm:$0xf]
    %v84 = vld [vmem:[#allocation3 + $0x10] sm:$0xf]
    %v85 = vld [vmem:[#allocation3 + $0x14] sm:$0xf]
    %v86 = vld [vmem:[#allocation3 + $0x18] sm:$0xf]
    %v87 = vld [vmem:[#allocation3 + $0x1c] sm:$0xf]
    %v88 = vld [vmem:[#allocation3 + $0x20] sm:$0xf]
    %v89 = vld [vmem:[#allocation3 + $0x24] sm:$0xf]
    %v90 = vld [vmem:[#allocation3 + $0x28] sm:$0xf]
    %v91 = vld [vmem:[#allocation3 + $0x2c] sm:$0xf]
    %v92 = vld [vmem:[#allocation3 + $0x30] sm:$0xf]
    %v93 = vld [vmem:[#allocation3 + $0x34] sm:$0xf]
    %v94 = vld [vmem:[#allocation3 + $0x38] sm:$0xf]
    %v95 = vld [vmem:[#allocation3 + $0x3c] sm:$0xf]
    %v96 = vld [vmem:[#allocation3 + $0x40] sm:$0xf]
    %v97 = vld [vmem:[#allocation3 + $0x44] sm:$0xf]
    %v98 = vld [vmem:[#allocation3 + $0x48] sm:$0xf]
    %v99 = vld [vmem:[#allocation3 + $0x4c] sm:$0xf]
    %v100 = vld [vmem:[#allocation3 + $0x50] sm:$0xf]
    %v101 = vld [vmem:[#allocation3 + $0x54] sm:$0xf]
    %v102 = vld [vmem:[#allocation3 + $0x58] sm:$0xf]
    %v103 = vld [vmem:[#allocation3 + $0x5c] sm:$0xf]
    %v104 = vunpack.c.l.bf16 %v80
    %v105 = vunpack.c.l.bf16 %v81
    %v106 = vunpack.c.l.bf16 %v82
    %v107 = vunpack.c.l.bf16 %v83
    %v108 = vunpack.c.l.bf16 %v84
    %v109 = vunpack.c.l.bf16 %v85
    %v110 = vunpack.c.l.bf16 %v86
    %v111 = vunpack.c.l.bf16 %v87
    %v112 = vunpack.c.l.bf16 %v88
    %v113 = vunpack.c.l.bf16 %v89
    %v114 = vunpack.c.l.bf16 %v90
    %v115 = vunpack.c.l.bf16 %v91
    %v116 = vunpack.c.l.bf16 %v92
    %v117 = vunpack.c.l.bf16 %v93
    %v118 = vunpack.c.l.bf16 %v94
    %v119 = vunpack.c.l.bf16 %v95
    %v120 = vunpack.c.l.bf16 %v96
    %v121 = vunpack.c.l.bf16 %v97
    %v122 = vunpack.c.l.bf16 %v98
    %v123 = vunpack.c.l.bf16 %v99
    %v124 = vunpack.c.l.bf16 %v100
    %v125 = vunpack.c.l.bf16 %v101
    %v126 = vunpack.c.l.bf16 %v102
    %v127 = vunpack.c.l.bf16 %v103
    %v128 = vpack.c.bf16 %v105, %v104
    %v129 = vpack.c.bf16 %v107, %v106
    %v130 = vpack.c.bf16 %v109, %v108
    %v131 = vpack.c.bf16 %v111, %v110
    %v132 = vpack.c.bf16 %v113, %v112
    %v133 = vpack.c.bf16 %v115, %v114
    %v134 = vpack.c.bf16 %v117, %v116
    %v135 = vpack.c.bf16 %v119, %v118
    %v136 = vpack.c.bf16 %v121, %v120
    %v137 = vpack.c.bf16 %v123, %v122
    %v138 = vpack.c.bf16 %v125, %v124
    %v139 = vpack.c.bf16 %v127, %v126
    %vm140 = vcmask 261120
    %141 = vst.msk [vmem:[#allocation2] sm:$0xff] %vm140, %v128
    %142 = vst.msk [vmem:[#allocation2 + $0x10] sm:$0xff] %vm140, %v129
    %143 = vst.msk [vmem:[#allocation2 + $0x20] sm:$0xff] %vm140, %v130
    %144 = vst.msk [vmem:[#allocation2 + $0x30] sm:$0xff] %vm140, %v131
    %145 = vst.msk [vmem:[#allocation2 + $0x40] sm:$0xff] %vm140, %v132
    %146 = vst.msk [vmem:[#allocation2 + $0x50] sm:$0xff] %vm140, %v133
    %147 = vst.msk [vmem:[#allocation2 + $0x60] sm:$0xff] %vm140, %v134
    %148 = vst.msk [vmem:[#allocation2 + $0x70] sm:$0xff] %vm140, %v135
    %149 = vst.msk [vmem:[#allocation2 + $0x80] sm:$0xff] %vm140, %v136
    %150 = vst.msk [vmem:[#allocation2 + $0x90] sm:$0xff] %vm140, %v137
    %151 = vst.msk [vmem:[#allocation2 + $0xa0] sm:$0xff] %vm140, %v138
    %152 = vst.msk [vmem:[#allocation2 + $0xb0] sm:$0xff] %vm140, %v139
    %v153 = vrot.slane %v104, 1
    %v154 = vrot.slane %v105, 1
    %v155 = vrot.slane %v106, 1
    %v156 = vrot.slane %v107, 1
    %v157 = vrot.slane %v108, 1
    %v158 = vrot.slane %v109, 1
    %v159 = vrot.slane %v110, 1
    %v160 = vrot.slane %v111, 1
    %v161 = vrot.slane %v112, 1
    %v162 = vrot.slane %v113, 1
    %v163 = vrot.slane %v114, 1
    %v164 = vrot.slane %v115, 1
    %v165 = vrot.slane %v116, 1
    %v166 = vrot.slane %v117, 1
    %v167 = vrot.slane %v118, 1
    %v168 = vrot.slane %v119, 1
    %v169 = vrot.slane %v120, 1
    %v170 = vrot.slane %v121, 1
    %v171 = vrot.slane %v122, 1
    %v172 = vrot.slane %v123, 1
    %v173 = vrot.slane %v124, 1
    %v174 = vrot.slane %v125, 1
    %v175 = vrot.slane %v126, 1
    %v176 = vrot.slane %v127, 1
    %v177 = vlaneseq
    %v178 = vshrl.u32 %v177, 7
    %vm179 = vcmp.lt.s32.totalorder %v178, 7
    %v180 = vsel %vm179, %v175, %v176
    %v181 = vsel %vm179, %v174, %v175
    %v182 = vsel %vm179, %v173, %v174
    %v183 = vsel %vm179, %v172, %v173
    %v184 = vsel %vm179, %v171, %v172
    %v185 = vsel %vm179, %v170, %v171
    %v186 = vsel %vm179, %v169, %v170
    %v187 = vsel %vm179, %v168, %v169
    %v188 = vsel %vm179, %v167, %v168
    %v189 = vsel %vm179, %v166, %v167
    %v190 = vsel %vm179, %v165, %v166
    %v191 = vsel %vm179, %v164, %v165
    %v192 = vsel %vm179, %v163, %v164
    %v193 = vsel %vm179, %v162, %v163
    %v194 = vsel %vm179, %v161, %v162
    %v195 = vsel %vm179, %v160, %v161
    %v196 = vsel %vm179, %v159, %v160
    %v197 = vsel %vm179, %v158, %v159
    %v198 = vsel %vm179, %v157, %v158
    %v199 = vsel %vm179, %v156, %v157
    %v200 = vsel %vm179, %v155, %v156
    %v201 = vsel %vm179, %v154, %v155
    %v202 = vsel %vm179, %v153, %v154
    %v203 = vsel %vm179, %v176, %v153
    %v204 = vpack.c.bf16 %v201, %v202
    %v205 = vpack.c.bf16 %v199, %v200
    %v206 = vpack.c.bf16 %v197, %v198
    %v207 = vpack.c.bf16 %v195, %v196
    %v208 = vpack.c.bf16 %v193, %v194
    %v209 = vpack.c.bf16 %v191, %v192
    %v210 = vpack.c.bf16 %v189, %v190
    %v211 = vpack.c.bf16 %v187, %v188
    %v212 = vpack.c.bf16 %v185, %v186
    %v213 = vpack.c.bf16 %v183, %v184
    %v214 = vpack.c.bf16 %v181, %v182
    %v215 = vpack.c.bf16 %v203, %v180
    %228 = vrot.lane.b32.xlu0 %v204, 32
    %v229 = vpop.permute.xlu0 %228
    %230 = vrot.lane.b32.xlu0 %v205, 32
    %v231 = vpop.permute.xlu0 %230
    %232 = vrot.lane.b32.xlu0 %v206, 32
    %v233 = vpop.permute.xlu0 %232
    %234 = vrot.lane.b32.xlu0 %v207, 32
    %v235 = vpop.permute.xlu0 %234
    %236 = vrot.lane.b32.xlu0 %v208, 32
    %v237 = vpop.permute.xlu0 %236
    %238 = vrot.lane.b32.xlu0 %v209, 32
    %v239 = vpop.permute.xlu0 %238
    %240 = vrot.lane.b32.xlu0 %v210, 32
    %v241 = vpop.permute.xlu0 %240
    %242 = vrot.lane.b32.xlu0 %v211, 32
    %v243 = vpop.permute.xlu0 %242
    %244 = vrot.lane.b32.xlu0 %v212, 32
    %v245 = vpop.permute.xlu0 %244
    %246 = vrot.lane.b32.xlu0 %v213, 32
    %v247 = vpop.permute.xlu0 %246
    %248 = vrot.lane.b32.xlu0 %v214, 32
    %v249 = vpop.permute.xlu0 %248
    %250 = vrot.lane.b32.xlu0 %v215, 32
    %v251 = vpop.permute.xlu0 %250
    %vm264 = vcmask 523520
    %265 = vst.msk [vmem:[#allocation2] sm:$0xff] %vm264, %v229
    %266 = vst.msk [vmem:[#allocation2 + $0x10] sm:$0xff] %vm264, %v231
    %267 = vst.msk [vmem:[#allocation2 + $0x20] sm:$0xff] %vm264, %v233
    %268 = vst.msk [vmem:[#allocation2 + $0x30] sm:$0xff] %vm264, %v235
    %269 = vst.msk [vmem:[#allocation2 + $0x40] sm:$0xff] %vm264, %v237
    %270 = vst.msk [vmem:[#allocation2 + $0x50] sm:$0xff] %vm264, %v239
    %271 = vst.msk [vmem:[#allocation2 + $0x60] sm:$0xff] %vm264, %v241
    %272 = vst.msk [vmem:[#allocation2 + $0x70] sm:$0xff] %vm264, %v243
    %273 = vst.msk [vmem:[#allocation2 + $0x80] sm:$0xff] %vm264, %v245
    %274 = vst.msk [vmem:[#allocation2 + $0x90] sm:$0xff] %vm264, %v247
    %275 = vst.msk [vmem:[#allocation2 + $0xa0] sm:$0xff] %vm264, %v249
    %276 = vst.msk [vmem:[#allocation2 + $0xb0] sm:$0xff] %vm264, %v251
    %v277 = vrot.slane %v104, 2
    %v278 = vrot.slane %v105, 2
    %v279 = vrot.slane %v106, 2
    %v280 = vrot.slane %v107, 2
    %v281 = vrot.slane %v108, 2
    %v282 = vrot.slane %v109, 2
    %v283 = vrot.slane %v110, 2
    %v284 = vrot.slane %v111, 2
    %v285 = vrot.slane %v112, 2
    %v286 = vrot.slane %v113, 2
    %v287 = vrot.slane %v114, 2
    %v288 = vrot.slane %v115, 2
    %v289 = vrot.slane %v116, 2
    %v290 = vrot.slane %v117, 2
    %v291 = vrot.slane %v118, 2
    %v292 = vrot.slane %v119, 2
    %v293 = vrot.slane %v120, 2
    %v294 = vrot.slane %v121, 2
    %v295 = vrot.slane %v122, 2
    %v296 = vrot.slane %v123, 2
    %v297 = vrot.slane %v124, 2
    %v298 = vrot.slane %v125, 2
    %v299 = vrot.slane %v126, 2
    %v300 = vrot.slane %v127, 2
    %vm301 = vcmp.lt.s32.totalorder %v178, 6
    %v302 = vsel %vm301, %v299, %v300
    %v303 = vsel %vm301, %v298, %v299
    %v304 = vsel %vm301, %v297, %v298
    %v305 = vsel %vm301, %v296, %v297
    %v306 = vsel %vm301, %v295, %v296
    %v307 = vsel %vm301, %v294, %v295
    %v308 = vsel %vm301, %v293, %v294
    %v309 = vsel %vm301, %v292, %v293
    %v310 = vsel %vm301, %v291, %v292
    %v311 = vsel %vm301, %v290, %v291
    %v312 = vsel %vm301, %v289, %v290
    %v313 = vsel %vm301, %v288, %v289
    %v314 = vsel %vm301, %v287, %v288
    %v315 = vsel %vm301, %v286, %v287
    %v316 = vsel %vm301, %v285, %v286
    %v317 = vsel %vm301, %v284, %v285
    %v318 = vsel %vm301, %v283, %v284
    %v319 = vsel %vm301, %v282, %v283
    %v320 = vsel %vm301, %v281, %v282
    %v321 = vsel %vm301, %v280, %v281
    %v322 = vsel %vm301, %v279, %v280
    %v323 = vsel %vm301, %v278, %v279
    %v324 = vsel %vm301, %v277, %v278
    %v325 = vsel %vm301, %v300, %v277
    %v326 = vpack.c.bf16 %v323, %v324
    %v327 = vpack.c.bf16 %v321, %v322
    %v328 = vpack.c.bf16 %v319, %v320
    %v329 = vpack.c.bf16 %v317, %v318
    %v330 = vpack.c.bf16 %v315, %v316
    %v331 = vpack.c.bf16 %v313, %v314
    %v332 = vpack.c.bf16 %v311, %v312
    %v333 = vpack.c.bf16 %v309, %v310
    %v334 = vpack.c.bf16 %v307, %v308
    %v335 = vpack.c.bf16 %v305, %v306
    %v336 = vpack.c.bf16 %v303, %v304
    %v337 = vpack.c.bf16 %v325, %v302
    %350 = vrot.lane.b32.xlu0 %v326, 64
    %v351 = vpop.permute.xlu0 %350
    %352 = vrot.lane.b32.xlu0 %v327, 64
    %v353 = vpop.permute.xlu0 %352
    %354 = vrot.lane.b32.xlu0 %v328, 64
    %v355 = vpop.permute.xlu0 %354
    %356 = vrot.lane.b32.xlu0 %v329, 64
    %v357 = vpop.permute.xlu0 %356
    %358 = vrot.lane.b32.xlu0 %v330, 64
    %v359 = vpop.permute.xlu0 %358
    %360 = vrot.lane.b32.xlu0 %v331, 64
    %v361 = vpop.permute.xlu0 %360
    %362 = vrot.lane.b32.xlu0 %v332, 64
    %v363 = vpop.permute.xlu0 %362
    %364 = vrot.lane.b32.xlu0 %v333, 64
    %v365 = vpop.permute.xlu0 %364
    %366 = vrot.lane.b32.xlu0 %v334, 64
    %v367 = vpop.permute.xlu0 %366
    %368 = vrot.lane.b32.xlu0 %v335, 64
    %v369 = vpop.permute.xlu0 %368
    %370 = vrot.lane.b32.xlu0 %v336, 64
    %v371 = vpop.permute.xlu0 %370
    %372 = vrot.lane.b32.xlu0 %v337, 64
    %v373 = vpop.permute.xlu0 %372
    %vm386 = vcmask 785920
    %387 = vst.msk [vmem:[#allocation2] sm:$0xff] %vm386, %v351
    %388 = vst.msk [vmem:[#allocation2 + $0x10] sm:$0xff] %vm386, %v353
    %389 = vst.msk [vmem:[#allocation2 + $0x20] sm:$0xff] %vm386, %v355
    %390 = vst.msk [vmem:[#allocation2 + $0x30] sm:$0xff] %vm386, %v357
    %391 = vst.msk [vmem:[#allocation2 + $0x40] sm:$0xff] %vm386, %v359
    %392 = vst.msk [vmem:[#allocation2 + $0x50] sm:$0xff] %vm386, %v361
    %393 = vst.msk [vmem:[#allocation2 + $0x60] sm:$0xff] %vm386, %v363
    %394 = vst.msk [vmem:[#allocation2 + $0x70] sm:$0xff] %vm386, %v365
    %395 = vst.msk [vmem:[#allocation2 + $0x80] sm:$0xff] %vm386, %v367
    %396 = vst.msk [vmem:[#allocation2 + $0x90] sm:$0xff] %vm386, %v369
    %397 = vst.msk [vmem:[#allocation2 + $0xa0] sm:$0xff] %vm386, %v371
    %398 = vst.msk [vmem:[#allocation2 + $0xb0] sm:$0xff] %vm386, %v373
    %v399 = vrot.slane %v104, 3
    %v400 = vrot.slane %v105, 3
    %v401 = vrot.slane %v106, 3
    %v402 = vrot.slane %v107, 3
    %v403 = vrot.slane %v108, 3
    %v404 = vrot.slane %v109, 3
    %v405 = vrot.slane %v110, 3
    %v406 = vrot.slane %v111, 3
    %v407 = vrot.slane %v112, 3
    %v408 = vrot.slane %v113, 3
    %v409 = vrot.slane %v114, 3
    %v410 = vrot.slane %v115, 3
    %v411 = vrot.slane %v116, 3
    %v412 = vrot.slane %v117, 3
    %v413 = vrot.slane %v118, 3
    %v414 = vrot.slane %v119, 3
    %v415 = vrot.slane %v120, 3
    %v416 = vrot.slane %v121, 3
    %v417 = vrot.slane %v122, 3
    %v418 = vrot.slane %v123, 3
    %v419 = vrot.slane %v124, 3
    %v420 = vrot.slane %v125, 3
    %v421 = vrot.slane %v126, 3
    %v422 = vrot.slane %v127, 3
    %vm423 = vcmp.lt.s32.totalorder %v178, 5
    %v424 = vsel %vm423, %v421, %v422
    %v425 = vsel %vm423, %v420, %v421
    %v426 = vsel %vm423, %v419, %v420
    %v427 = vsel %vm423, %v418, %v419
    %v428 = vsel %vm423, %v417, %v418
    %v429 = vsel %vm423, %v416, %v417
    %v430 = vsel %vm423, %v415, %v416
    %v431 = vsel %vm423, %v414, %v415
    %v432 = vsel %vm423, %v413, %v414
    %v433 = vsel %vm423, %v412, %v413
    %v434 = vsel %vm423, %v411, %v412
    %v435 = vsel %vm423, %v410, %v411
    %v436 = vsel %vm423, %v409, %v410
    %v437 = vsel %vm423, %v408, %v409
    %v438 = vsel %vm423, %v407, %v408
    %v439 = vsel %vm423, %v406, %v407
    %v440 = vsel %vm423, %v405, %v406
    %v441 = vsel %vm423, %v404, %v405
    %v442 = vsel %vm423, %v403, %v404
    %v443 = vsel %vm423, %v402, %v403
    %v444 = vsel %vm423, %v401, %v402
    %v445 = vsel %vm423, %v400, %v401
    %v446 = vsel %vm423, %v399, %v400
    %v447 = vsel %vm423, %v422, %v399
    %v448 = vpack.c.bf16 %v445, %v446
    %v449 = vpack.c.bf16 %v443, %v444
    %v450 = vpack.c.bf16 %v441, %v442
    %v451 = vpack.c.bf16 %v439, %v440
    %v452 = vpack.c.bf16 %v437, %v438
    %v453 = vpack.c.bf16 %v435, %v436
    %v454 = vpack.c.bf16 %v433, %v434
    %v455 = vpack.c.bf16 %v431, %v432
    %v456 = vpack.c.bf16 %v429, %v430
    %v457 = vpack.c.bf16 %v427, %v428
    %v458 = vpack.c.bf16 %v425, %v426
    %v459 = vpack.c.bf16 %v447, %v424
    %472 = vrot.lane.b32.xlu0 %v448, 96
    %v473 = vpop.permute.xlu0 %472
    %474 = vrot.lane.b32.xlu0 %v449, 96
    %v475 = vpop.permute.xlu0 %474
    %476 = vrot.lane.b32.xlu0 %v450, 96
    %v477 = vpop.permute.xlu0 %476
    %478 = vrot.lane.b32.xlu0 %v451, 96
    %v479 = vpop.permute.xlu0 %478
    %480 = vrot.lane.b32.xlu0 %v452, 96
    %v481 = vpop.permute.xlu0 %480
    %482 = vrot.lane.b32.xlu0 %v453, 96
    %v483 = vpop.permute.xlu0 %482
    %484 = vrot.lane.b32.xlu0 %v454, 96
    %v485 = vpop.permute.xlu0 %484
    %486 = vrot.lane.b32.xlu0 %v455, 96
    %v487 = vpop.permute.xlu0 %486
    %488 = vrot.lane.b32.xlu0 %v456, 96
    %v489 = vpop.permute.xlu0 %488
    %490 = vrot.lane.b32.xlu0 %v457, 96
    %v491 = vpop.permute.xlu0 %490
    %492 = vrot.lane.b32.xlu0 %v458, 96
    %v493 = vpop.permute.xlu0 %492
    %494 = vrot.lane.b32.xlu0 %v459, 96
    %v495 = vpop.permute.xlu0 %494
    %vm508 = vcmask 1048320
    %509 = vst.msk [vmem:[#allocation2] sm:$0xff] %vm508, %v473
    %510 = vst.msk [vmem:[#allocation2 + $0x10] sm:$0xff] %vm508, %v475
    %511 = vst.msk [vmem:[#allocation2 + $0x20] sm:$0xff] %vm508, %v477
    %512 = vst.msk [vmem:[#allocation2 + $0x30] sm:$0xff] %vm508, %v479
    %513 = vst.msk [vmem:[#allocation2 + $0x40] sm:$0xff] %vm508, %v481
    %514 = vst.msk [vmem:[#allocation2 + $0x50] sm:$0xff] %vm508, %v483
    %515 = vst.msk [vmem:[#allocation2 + $0x60] sm:$0xff] %vm508, %v485
    %516 = vst.msk [vmem:[#allocation2 + $0x70] sm:$0xff] %vm508, %v487
    %517 = vst.msk [vmem:[#allocation2 + $0x80] sm:$0xff] %vm508, %v489
    %518 = vst.msk [vmem:[#allocation2 + $0x90] sm:$0xff] %vm508, %v491
    %519 = vst.msk [vmem:[#allocation2 + $0xa0] sm:$0xff] %vm508, %v493
    %520 = vst.msk [vmem:[#allocation2 + $0xb0] sm:$0xff] %vm508, %v495
    %v521 = vrot.slane %v104, 4
    %v522 = vrot.slane %v105, 4
    %v523 = vrot.slane %v106, 4
    %v524 = vrot.slane %v107, 4
    %v525 = vrot.slane %v108, 4
    %v526 = vrot.slane %v109, 4
    %v527 = vrot.slane %v110, 4
    %v528 = vrot.slane %v111, 4
    %v529 = vrot.slane %v112, 4
    %v530 = vrot.slane %v113, 4
    %v531 = vrot.slane %v114, 4
    %v532 = vrot.slane %v115, 4
    %v533 = vrot.slane %v116, 4
    %v534 = vrot.slane %v117, 4
    %v535 = vrot.slane %v118, 4
    %v536 = vrot.slane %v119, 4
    %v537 = vrot.slane %v120, 4
    %v538 = vrot.slane %v121, 4
    %v539 = vrot.slane %v122, 4
    %v540 = vrot.slane %v123, 4
    %v541 = vrot.slane %v124, 4
    %v542 = vrot.slane %v125, 4
    %v543 = vrot.slane %v126, 4
    %v544 = vrot.slane %v127, 4
    %vm545 = vcmp.lt.s32.totalorder %v178, 4
    %v546 = vsel %vm545, %v543, %v544
    %v547 = vsel %vm545, %v542, %v543
    %v548 = vsel %vm545, %v541, %v542
    %v549 = vsel %vm545, %v540, %v541
    %v550 = vsel %vm545, %v539, %v540
    %v551 = vsel %vm545, %v538, %v539
    %v552 = vsel %vm545, %v537, %v538
    %v553 = vsel %vm545, %v536, %v537
    %v554 = vsel %vm545, %v535, %v536
    %v555 = vsel %vm545, %v534, %v535
    %v556 = vsel %vm545, %v533, %v534
    %v557 = vsel %vm545, %v532, %v533
    %v558 = vsel %vm545, %v531, %v532
    %v559 = vsel %vm545, %v530, %v531
    %v560 = vsel %vm545, %v529, %v530
    %v561 = vsel %vm545, %v528, %v529
    %v562 = vsel %vm545, %v527, %v528
    %v563 = vsel %vm545, %v526, %v527
    %v564 = vsel %vm545, %v525, %v526
    %v565 = vsel %vm545, %v524, %v525
    %v566 = vsel %vm545, %v523, %v524
    %v567 = vsel %vm545, %v522, %v523
    %v568 = vsel %vm545, %v521, %v522
    %v569 = vsel %vm545, %v544, %v521
    %v570 = vpack.c.bf16 %v567, %v568
    %v571 = vpack.c.bf16 %v565, %v566
    %v572 = vpack.c.bf16 %v563, %v564
    %v573 = vpack.c.bf16 %v561, %v562
    %v574 = vpack.c.bf16 %v559, %v560
    %v575 = vpack.c.bf16 %v557, %v558
    %v576 = vpack.c.bf16 %v555, %v556
    %v577 = vpack.c.bf16 %v553, %v554
    %v578 = vpack.c.bf16 %v551, %v552
    %v579 = vpack.c.bf16 %v549, %v550
    %v580 = vpack.c.bf16 %v547, %v548
    %v581 = vpack.c.bf16 %v569, %v546
    %582 = vst.msk [vmem:[#allocation2 + $0x8] sm:$0xff] %vm140, %v570
    %583 = vst.msk [vmem:[#allocation2 + $0x18] sm:$0xff] %vm140, %v571
    %584 = vst.msk [vmem:[#allocation2 + $0x28] sm:$0xff] %vm140, %v572
    %585 = vst.msk [vmem:[#allocation2 + $0x38] sm:$0xff] %vm140, %v573
    %586 = vst.msk [vmem:[#allocation2 + $0x48] sm:$0xff] %vm140, %v574
    %587 = vst.msk [vmem:[#allocation2 + $0x58] sm:$0xff] %vm140, %v575
    %588 = vst.msk [vmem:[#allocation2 + $0x68] sm:$0xff] %vm140, %v576
    %589 = vst.msk [vmem:[#allocation2 + $0x78] sm:$0xff] %vm140, %v577
    %590 = vst.msk [vmem:[#allocation2 + $0x88] sm:$0xff] %vm140, %v578
    %591 = vst.msk [vmem:[#allocation2 + $0x98] sm:$0xff] %vm140, %v579
    %592 = vst.msk [vmem:[#allocation2 + $0xa8] sm:$0xff] %vm140, %v580
    %593 = vst.msk [vmem:[#allocation2 + $0xb8] sm:$0xff] %vm140, %v581
    %vm594 = vcmask 1047808
    %595 = vst.msk [vmem:[#allocation2 + $0x8] sm:$0xff] %vm594, 0
    %596 = vst.msk [vmem:[#allocation2 + $0x18] sm:$0xff] %vm594, 0
    %597 = vst.msk [vmem:[#allocation2 + $0x28] sm:$0xff] %vm594, 0
    %598 = vst.msk [vmem:[#allocation2 + $0x38] sm:$0xff] %vm594, 0
    %599 = vst.msk [vmem:[#allocation2 + $0x48] sm:$0xff] %vm594, 0
    %600 = vst.msk [vmem:[#allocation2 + $0x58] sm:$0xff] %vm594, 0
    %601 = vst.msk [vmem:[#allocation2 + $0x68] sm:$0xff] %vm594, 0
    %602 = vst.msk [vmem:[#allocation2 + $0x78] sm:$0xff] %vm594, 0
    %603 = vst.msk [vmem:[#allocation2 + $0x88] sm:$0xff] %vm594, 0
    %604 = vst.msk [vmem:[#allocation2 + $0x98] sm:$0xff] %vm594, 0
    %605 = vst.msk [vmem:[#allocation2 + $0xa8] sm:$0xff] %vm594, 0
    %606 = vst.msk [vmem:[#allocation2 + $0xb8] sm:$0xff] %vm594, 0
    %v607 = vld [vmem:[#allocation2] sm:$0xff]
    %v608 = vld [vmem:[#allocation2 + $0x8] sm:$0xff]
    %v609 = vld [vmem:[#allocation2 + $0x10] sm:$0xff]
    %v610 = vld [vmem:[#allocation2 + $0x18] sm:$0xff]
    %v611 = vld [vmem:[#allocation2 + $0x20] sm:$0xff]
    %v612 = vld [vmem:[#allocation2 + $0x28] sm:$0xff]
    %v613 = vld [vmem:[#allocation2 + $0x30] sm:$0xff]
    %v614 = vld [vmem:[#allocation2 + $0x38] sm:$0xff]
    %v615 = vld [vmem:[#allocation2 + $0x40] sm:$0xff]
    %v616 = vld [vmem:[#allocation2 + $0x48] sm:$0xff]
    %v617 = vld [vmem:[#allocation2 + $0x50] sm:$0xff]
    %v618 = vld [vmem:[#allocation2 + $0x58] sm:$0xff]
    %v619 = vld [vmem:[#allocation2 + $0x60] sm:$0xff]
    %v620 = vld [vmem:[#allocation2 + $0x68] sm:$0xff]
    %v621 = vld [vmem:[#allocation2 + $0x70] sm:$0xff]
    %v622 = vld [vmem:[#allocation2 + $0x78] sm:$0xff]
    %v623 = vld [vmem:[#allocation2 + $0x80] sm:$0xff]
    %v624 = vld [vmem:[#allocation2 + $0x88] sm:$0xff]
    %v625 = vld [vmem:[#allocation2 + $0x90] sm:$0xff]
    %v626 = vld [vmem:[#allocation2 + $0x98] sm:$0xff]
    %v627 = vld [vmem:[#allocation2 + $0xa0] sm:$0xff]
    %v628 = vld [vmem:[#allocation2 + $0xa8] sm:$0xff]
    %v629 = vld [vmem:[#allocation2 + $0xb0] sm:$0xff]
    %v630 = vld [vmem:[#allocation2 + $0xb8] sm:$0xff]
    %v631 = vld [vmem:[#allocation6] sm:$0xf]
    %v632 = vld [vmem:[#allocation6 + $0x4] sm:$0xf]
    %v633 = vld [vmem:[#allocation6 + $0x8] sm:$0xf]
    %v634 = vld [vmem:[#allocation6 + $0xc] sm:$0xf]
    %v635 = vld [vmem:[#allocation6 + $0x10] sm:$0xf]
    %v636 = vld [vmem:[#allocation6 + $0x14] sm:$0xf]
    %v637 = vld [vmem:[#allocation6 + $0x18] sm:$0xf]
    %v638 = vld [vmem:[#allocation6 + $0x1c] sm:$0xf]
    %v639 = vld [vmem:[#allocation6 + $0x20] sm:$0xf]
    %v640 = vld [vmem:[#allocation6 + $0x24] sm:$0xf]
    %v641 = vld [vmem:[#allocation6 + $0x28] sm:$0xf]
    %v642 = vld [vmem:[#allocation6 + $0x2c] sm:$0xf]
    %v643 = vld [vmem:[#allocation6 + $0x30] sm:$0xf]
    %v644 = vld [vmem:[#allocation6 + $0x34] sm:$0xf]
    %v645 = vld [vmem:[#allocation6 + $0x38] sm:$0xf]
    %v646 = vld [vmem:[#allocation6 + $0x3c] sm:$0xf]
    %v647 = vld [vmem:[#allocation6 + $0x40] sm:$0xf]
    %v648 = vld [vmem:[#allocation6 + $0x44] sm:$0xf]
    %v649 = vld [vmem:[#allocation6 + $0x48] sm:$0xf]
    %v650 = vld [vmem:[#allocation6 + $0x4c] sm:$0xf]
    %v651 = vld [vmem:[#allocation6 + $0x50] sm:$0xf]
    %v652 = vld [vmem:[#allocation6 + $0x54] sm:$0xf]
    %v653 = vld [vmem:[#allocation6 + $0x58] sm:$0xf]
    %v654 = vld [vmem:[#allocation6 + $0x5c] sm:$0xf]
    %v655 = vld [vmem:[#allocation6 + $0x60] sm:$0xf]
    %v656 = vld [vmem:[#allocation6 + $0x64] sm:$0xf]
    %v657 = vld [vmem:[#allocation6 + $0x68] sm:$0xf]
    %v658 = vld [vmem:[#allocation6 + $0x6c] sm:$0xf]
    %v659 = vld [vmem:[#allocation6 + $0x70] sm:$0xf]
    %v660 = vld [vmem:[#allocation6 + $0x74] sm:$0xf]
    %v661 = vld [vmem:[#allocation6 + $0x78] sm:$0xf]
    %v662 = vld [vmem:[#allocation6 + $0x7c] sm:$0xf]
    %v663 = vld [vmem:[%s2] sm:$0x1]
    %v665 = vlaneseq
    %v666 = vshrl.u32 %v665, 7
    %v667 = vsub.s32 0, %v666
    %v668 = vrot.slane %v663, %v667
    %v702 = vunpack.c.l.b16 %v631
    %v703 = vunpack.c.l.b16 %v632
    %v704 = vunpack.c.l.b16 %v633
    %v705 = vunpack.c.l.b16 %v634
    %v706 = vunpack.c.l.b16 %v635
    %v707 = vunpack.c.l.b16 %v636
    %v708 = vunpack.c.l.b16 %v637
    %v709 = vunpack.c.l.b16 %v638
    %v710 = vunpack.c.l.b16 %v639
    %v711 = vunpack.c.l.b16 %v640
    %v712 = vunpack.c.l.b16 %v641
    %v713 = vunpack.c.l.b16 %v642
    %v714 = vunpack.c.l.b16 %v643
    %v715 = vunpack.c.l.b16 %v644
    %v716 = vunpack.c.l.b16 %v645
    %v717 = vunpack.c.l.b16 %v646
    %v718 = vunpack.c.l.b16 %v647
    %v719 = vunpack.c.l.b16 %v648
    %v720 = vunpack.c.l.b16 %v649
    %v721 = vunpack.c.l.b16 %v650
    %v722 = vunpack.c.l.b16 %v651
    %v723 = vunpack.c.l.b16 %v652
    %v724 = vunpack.c.l.b16 %v653
    %v725 = vunpack.c.l.b16 %v654
    %v726 = vunpack.c.l.b16 %v655
    %v727 = vunpack.c.l.b16 %v656
    %v728 = vunpack.c.l.b16 %v657
    %v729 = vunpack.c.l.b16 %v658
    %v730 = vunpack.c.l.b16 %v659
    %v731 = vunpack.c.l.b16 %v660
    %v732 = vunpack.c.l.b16 %v661
    %v733 = vunpack.c.l.b16 %v662
    %v734 = vpack.c.b16 %v703, %v702
    %v735 = vpack.c.b16 %v705, %v704
    %v736 = vpack.c.b16 %v707, %v706
    %v737 = vpack.c.b16 %v709, %v708
    %v738 = vpack.c.b16 %v711, %v710
    %v739 = vpack.c.b16 %v713, %v712
    %v740 = vpack.c.b16 %v715, %v714
    %v741 = vpack.c.b16 %v717, %v716
    %v742 = vpack.c.b16 %v719, %v718
    %v743 = vpack.c.b16 %v721, %v720
    %v744 = vpack.c.b16 %v723, %v722
    %v745 = vpack.c.b16 %v725, %v724
    %v746 = vpack.c.b16 %v727, %v726
    %v747 = vpack.c.b16 %v729, %v728
    %v748 = vpack.c.b16 %v731, %v730
    %v749 = vpack.c.b16 %v733, %v732
    %766 = vmatprep.subr.bf16.mxu0 0
    %767 = vmatpush1.bf16.msra.mxu0 %v734
    %768 = vmatprep.subr.bf16.mxu0 0
    %769 = vmatpush1.bf16.msra.mxu0 %v735
    %770 = vmatprep.subr.bf16.mxu0 0
    %771 = vmatpush1.bf16.msra.mxu0 %v736
    %772 = vmatprep.subr.bf16.mxu0 0
    %773 = vmatpush1.bf16.msra.mxu0 %v737
    %774 = vmatprep.subr.bf16.mxu0 0
    %775 = vmatpush1.bf16.msra.mxu0 %v738
    %776 = vmatprep.subr.bf16.mxu0 0
    %777 = vmatpush1.bf16.msra.mxu0 %v739
    %778 = vmatprep.subr.bf16.mxu0 0
    %779 = vmatpush1.bf16.msra.mxu0 %v740
    %780 = vmatprep.subr.bf16.mxu0 0
    %781 = vmatpush1.bf16.msra.mxu0 %v741
    %782 = vmatprep.subr.bf16.mxu0 0
    %783 = vmatpush1.bf16.msra.mxu0 %v742
    %784 = vmatprep.subr.bf16.mxu0 0
    %785 = vmatpush1.bf16.msra.mxu0 %v743
    %786 = vmatprep.subr.bf16.mxu0 0
    %787 = vmatpush1.bf16.msra.mxu0 %v744
    %788 = vmatprep.subr.bf16.mxu0 0
    %789 = vmatpush1.bf16.msra.mxu0 %v745
    %790 = vmatprep.subr.bf16.mxu0 0
    %791 = vmatpush1.bf16.msra.mxu0 %v746
    %792 = vmatprep.subr.bf16.mxu0 0
    %793 = vmatpush1.bf16.msra.mxu0 %v747
    %794 = vmatprep.subr.bf16.mxu0 0
    %795 = vmatpush1.bf16.msra.mxu0 %v748
    %796 = vmatprep.subr.bf16.mxu0 0
    %797 = vmatpush1.bf16.msra.mxu0 %v749
    %798 = vmatprep.mubr.bf16.mxu0 %v608
    %799 = vmatmul.mubr.bf16.gmra.mrb[0].mxu0 %v607
    %v800 = vpop.f32.mrb[0].mxu0
    %v801 = vadd.f32 %v668, %v800
    %v802 = vpop.f32.mrb[0].mxu0
    %v803 = vpop.f32.mrb[0].mxu0
    %v804 = vadd.f32 %v668, %v803
    %v805 = vpop.f32.mrb[0].mxu0
    %806 = vmatprep.mubr.bf16.mxu0 %v610
    %807 = vmatmul.mubr.bf16.gmra.mrb[0].mxu0 %v609
    %v808 = vpop.f32.mrb[0].mxu0
    %v809 = vadd.f32 %v668, %v808
    %v810 = vpop.f32.mrb[0].mxu0
    %v811 = vpop.f32.mrb[0].mxu0
    %v812 = vadd.f32 %v668, %v811
    %v813 = vpop.f32.mrb[0].mxu0
    %814 = vmatprep.mubr.bf16.mxu0 %v612
    %815 = vmatmul.mubr.bf16.gmra.mrb[0].mxu0 %v611
    %v816 = vpop.f32.mrb[0].mxu0
    %v817 = vadd.f32 %v668, %v816
    %v818 = vpop.f32.mrb[0].mxu0
    %v819 = vpop.f32.mrb[0].mxu0
    %v820 = vadd.f32 %v668, %v819
    %v821 = vpop.f32.mrb[0].mxu0
    %822 = vmatprep.mubr.bf16.mxu0 %v614
    %823 = vmatmul.mubr.bf16.gmra.mrb[0].mxu0 %v613
    %v824 = vpop.f32.mrb[0].mxu0
    %v825 = vadd.f32 %v668, %v824
    %v826 = vpop.f32.mrb[0].mxu0
    %v827 = vpop.f32.mrb[0].mxu0
    %v828 = vadd.f32 %v668, %v827
    %v829 = vpop.f32.mrb[0].mxu0
    %830 = vmatprep.mubr.bf16.mxu0 %v616
    %831 = vmatmul.mubr.bf16.gmra.mrb[0].mxu0 %v615
    %v832 = vpop.f32.mrb[0].mxu0
    %v833 = vadd.f32 %v668, %v832
    %v834 = vpop.f32.mrb[0].mxu0
    %v835 = vpop.f32.mrb[0].mxu0
    %v836 = vadd.f32 %v668, %v835
    %v837 = vpop.f32.mrb[0].mxu0
    %838 = vmatprep.mubr.bf16.mxu0 %v618
    %839 = vmatmul.mubr.bf16.gmra.mrb[0].mxu0 %v617
    %v840 = vpop.f32.mrb[0].mxu0
    %v841 = vadd.f32 %v668, %v840
    %v842 = vpop.f32.mrb[0].mxu0
    %v843 = vpop.f32.mrb[0].mxu0
    %v844 = vadd.f32 %v668, %v843
    %v845 = vpop.f32.mrb[0].mxu0
    %846 = vmatprep.mubr.bf16.mxu0 %v620
    %847 = vmatmul.mubr.bf16.gmra.mrb[0].mxu0 %v619
    %v848 = vpop.f32.mrb[0].mxu0
    %v849 = vadd.f32 %v668, %v848
    %v850 = vpop.f32.mrb[0].mxu0
    %v851 = vpop.f32.mrb[0].mxu0
    %v852 = vadd.f32 %v668, %v851
    %v853 = vpop.f32.mrb[0].mxu0
    %854 = vmatprep.mubr.bf16.mxu0 %v622
    %855 = vmatmul.mubr.bf16.gmra.mrb[0].mxu0 %v621
    %v856 = vpop.f32.mrb[0].mxu0
    %v857 = vadd.f32 %v668, %v856
    %v858 = vpop.f32.mrb[0].mxu0
    %v859 = vpop.f32.mrb[0].mxu0
    %v860 = vadd.f32 %v668, %v859
    %v861 = vpop.f32.mrb[0].mxu0
    %862 = vmatprep.mubr.bf16.mxu0 %v624
    %863 = vmatmul.mubr.bf16.gmra.mrb[0].mxu0 %v623
    %v864 = vpop.f32.mrb[0].mxu0
    %v865 = vadd.f32 %v668, %v864
    %v866 = vpop.f32.mrb[0].mxu0
    %v867 = vpop.f32.mrb[0].mxu0
    %v868 = vadd.f32 %v668, %v867
    %v869 = vpop.f32.mrb[0].mxu0
    %870 = vmatprep.mubr.bf16.mxu0 %v626
    %871 = vmatmul.mubr.bf16.gmra.mrb[0].mxu0 %v625
    %v872 = vpop.f32.mrb[0].mxu0
    %v873 = vadd.f32 %v668, %v872
    %v874 = vpop.f32.mrb[0].mxu0
    %v875 = vpop.f32.mrb[0].mxu0
    %v876 = vadd.f32 %v668, %v875
    %v877 = vpop.f32.mrb[0].mxu0
    %878 = vmatprep.mubr.bf16.mxu0 %v628
    %879 = vmatmul.mubr.bf16.gmra.mrb[0].mxu0 %v627
    %v880 = vpop.f32.mrb[0].mxu0
    %v881 = vadd.f32 %v668, %v880
    %v882 = vpop.f32.mrb[0].mxu0
    %v883 = vpop.f32.mrb[0].mxu0
    %v884 = vadd.f32 %v668, %v883
    %v885 = vpop.f32.mrb[0].mxu0
    %886 = vmatprep.mubr.bf16.mxu0 %v630
    %887 = vmatmul.mubr.bf16.gmra.mrb[0].mxu0 %v629
    %v888 = vpop.f32.mrb[0].mxu0
    %v889 = vadd.f32 %v668, %v888
    %v890 = vpop.f32.mrb[0].mxu0
    %v891 = vpop.f32.mrb[0].mxu0
    %v892 = vadd.f32 %v668, %v891
    %v893 = vpop.f32.mrb[0].mxu0
    %894 = vdwg.mxu0
    %v895 = vmax.f32 %v801, 0.0
    %v896 = vmax.f32 %v804, 0.0
    %v897 = vmax.f32 %v809, 0.0
    %v898 = vmax.f32 %v812, 0.0
    %v899 = vmax.f32 %v817, 0.0
    %v900 = vmax.f32 %v820, 0.0
    %v901 = vmax.f32 %v825, 0.0
    %v902 = vmax.f32 %v828, 0.0
    %v903 = vmax.f32 %v833, 0.0
    %v904 = vmax.f32 %v836, 0.0
    %v905 = vmax.f32 %v841, 0.0
    %v906 = vmax.f32 %v844, 0.0
    %v907 = vmax.f32 %v849, 0.0
    %v908 = vmax.f32 %v852, 0.0
    %v909 = vmax.f32 %v857, 0.0
    %v910 = vmax.f32 %v860, 0.0
    %v911 = vmax.f32 %v865, 0.0
    %v912 = vmax.f32 %v868, 0.0
    %v913 = vmax.f32 %v873, 0.0
    %v914 = vmax.f32 %v876, 0.0
    %v915 = vmax.f32 %v881, 0.0
    %v916 = vmax.f32 %v884, 0.0
    %v917 = vmax.f32 %v889, 0.0
    %v918 = vmax.f32 %v892, 0.0
    %v919 = vld [vmem:[#allocation8] sm:$0xff]
    %v920 = vld [vmem:[#allocation8 + $0x8] sm:$0xff]
    %v921 = vld [vmem:[#allocation8 + $0x10] sm:$0xff]
    %v922 = vmul.f32 %v895, %v919
    %v923 = vmul.f32 %v896, %v920
    %v924 = vmul.f32 %v897, %v921
    %v925 = vmul.f32 %v898, %v919
    %v926 = vmul.f32 %v899, %v920
    %v927 = vmul.f32 %v900, %v921
    %v928 = vmul.f32 %v901, %v919
    %v929 = vmul.f32 %v902, %v920
    %v930 = vmul.f32 %v903, %v921
    %v931 = vmul.f32 %v904, %v919
    %v932 = vmul.f32 %v905, %v920
    %v933 = vmul.f32 %v906, %v921
    %v934 = vmul.f32 %v907, %v919
    %v935 = vmul.f32 %v908, %v920
    %v936 = vmul.f32 %v909, %v921
    %v937 = vmul.f32 %v910, %v919
    %v938 = vmul.f32 %v911, %v920
    %v939 = vmul.f32 %v912, %v921
    %v940 = vmul.f32 %v913, %v919
    %v941 = vmul.f32 %v914, %v920
    %v942 = vmul.f32 %v915, %v921
    %v943 = vmul.f32 %v916, %v919
    %v944 = vmul.f32 %v917, %v920
    %v945 = vmul.f32 %v918, %v921
    %v946 = vmax.f32 %v922, %v923
    %v947 = vmax.f32 %v946, %v924
    %v948 = vrot.slane %v947, 4
    %v949 = vmax.f32 %v947, %v948
    %v950 = vrot.slane %v949, 2
    %v951 = vmax.f32 %v949, %v950
    %v952 = vrot.slane %v951, 1
    %v953 = vmax.f32 %v951, %v952
    %v954 = vmax.f32 %v925, %v926
    %v955 = vmax.f32 %v954, %v927
    %v956 = vrot.slane %v955, 4
    %v957 = vmax.f32 %v955, %v956
    %v958 = vrot.slane %v957, 2
    %v959 = vmax.f32 %v957, %v958
    %v960 = vrot.slane %v959, 1
    %v961 = vmax.f32 %v959, %v960
    %v962 = vmax.f32 %v928, %v929
    %v963 = vmax.f32 %v962, %v930
    %v964 = vrot.slane %v963, 4
    %v965 = vmax.f32 %v963, %v964
    %v966 = vrot.slane %v965, 2
    %v967 = vmax.f32 %v965, %v966
    %v968 = vrot.slane %v967, 1
    %v969 = vmax.f32 %v967, %v968
    %v970 = vmax.f32 %v931, %v932
    %v971 = vmax.f32 %v970, %v933
    %v972 = vrot.slane %v971, 4
    %v973 = vmax.f32 %v971, %v972
    %v974 = vrot.slane %v973, 2
    %v975 = vmax.f32 %v973, %v974
    %v976 = vrot.slane %v975, 1
    %v977 = vmax.f32 %v975, %v976
    %v978 = vmax.f32 %v934, %v935
    %v979 = vmax.f32 %v978, %v936
    %v980 = vrot.slane %v979, 4
    %v981 = vmax.f32 %v979, %v980
    %v982 = vrot.slane %v981, 2
    %v983 = vmax.f32 %v981, %v982
    %v984 = vrot.slane %v983, 1
    %v985 = vmax.f32 %v983, %v984
    %v986 = vmax.f32 %v937, %v938
    %v987 = vmax.f32 %v986, %v939
    %v988 = vrot.slane %v987, 4
    %v989 = vmax.f32 %v987, %v988
    %v990 = vrot.slane %v989, 2
    %v991 = vmax.f32 %v989, %v990
    %v992 = vrot.slane %v991, 1
    %v993 = vmax.f32 %v991, %v992
    %v994 = vmax.f32 %v940, %v941
    %v995 = vmax.f32 %v994, %v942
    %v996 = vrot.slane %v995, 4
    %v997 = vmax.f32 %v995, %v996
    %v998 = vrot.slane %v997, 2
    %v999 = vmax.f32 %v997, %v998
    %v1000 = vrot.slane %v999, 1
    %v1001 = vmax.f32 %v999, %v1000
    %v1002 = vmax.f32 %v943, %v944
    %v1003 = vmax.f32 %v1002, %v945
    %v1004 = vrot.slane %v1003, 4
    %v1005 = vmax.f32 %v1003, %v1004
    %v1006 = vrot.slane %v1005, 2
    %v1007 = vmax.f32 %v1005, %v1006
    %v1008 = vrot.slane %v1007, 1
    %v1009 = vmax.f32 %v1007, %v1008
    %v1010 = vpack.c.bf16 %v953, %v953
    %v1011 = vpack.c.bf16 %v961, %v961
    %v1012 = vpack.c.bf16 %v969, %v969
    %v1013 = vpack.c.bf16 %v977, %v977
    %v1014 = vpack.c.bf16 %v985, %v985
    %v1015 = vpack.c.bf16 %v993, %v993
    %v1016 = vpack.c.bf16 %v1001, %v1001
    %v1017 = vpack.c.bf16 %v1009, %v1009
    %v1018 = vld [vmem:[#allocation9] sm:$0xf]
    %v1019 = vld [vmem:[#allocation9 + $0x4] sm:$0xf]
    %v1020 = vld [vmem:[#allocation9 + $0x8] sm:$0xf]
    %v1021 = vld [vmem:[#allocation9 + $0xc] sm:$0xf]
    %v1022 = vld [vmem:[#allocation9 + $0x10] sm:$0xf]
    %v1023 = vld [vmem:[#allocation9 + $0x14] sm:$0xf]
    %v1024 = vld [vmem:[#allocation9 + $0x18] sm:$0xf]
    %v1025 = vld [vmem:[#allocation9 + $0x1c] sm:$0xf]
    %v1026 = vld [vmem:[#allocation9 + $0x20] sm:$0xf]
    %v1027 = vld [vmem:[#allocation9 + $0x24] sm:$0xf]
    %v1028 = vld [vmem:[#allocation9 + $0x28] sm:$0xf]
    %v1029 = vld [vmem:[#allocation9 + $0x2c] sm:$0xf]
    %v1030 = vld [vmem:[#allocation9 + $0x30] sm:$0xf]
    %v1031 = vld [vmem:[#allocation9 + $0x34] sm:$0xf]
    %v1032 = vld [vmem:[#allocation9 + $0x38] sm:$0xf]
    %v1033 = vld [vmem:[#allocation9 + $0x3c] sm:$0xf]
    %v1034 = vld [vmem:[%s5] sm:$0x1]
    %v1036 = vlaneseq
    %v1037 = vshrl.u32 %v1036, 7
    %v1038 = vsub.s32 0, %v1037
    %v1039 = vrot.slane %v1034, %v1038
    %v1049 = vunpack.c.l.b16 %v1010
    %v1050 = vunpack.c.l.b16 %v1011
    %v1051 = vunpack.c.l.b16 %v1012
    %v1052 = vunpack.c.l.b16 %v1013
    %v1053 = vunpack.c.l.b16 %v1014
    %v1054 = vunpack.c.l.b16 %v1015
    %v1055 = vunpack.c.l.b16 %v1016
    %v1056 = vunpack.c.l.b16 %v1017
    %vm1057 = vcmask 1041409
    %v1058 = vsel %vm1057, %v1050, %v1049
    %vm1059 = vcmask 1042434
    %v1060 = vsel %vm1059, %v1051, %v1058
    %vm1061 = vcmask 1043459
    %v1062 = vsel %vm1061, %v1052, %v1060
    %vm1063 = vcmask 1044484
    %v1064 = vsel %vm1063, %v1053, %v1062
    %vm1065 = vcmask 1045509
    %v1066 = vsel %vm1065, %v1054, %v1064
    %vm1067 = vcmask 1046534
    %v1068 = vsel %vm1067, %v1055, %v1066
    %vm1069 = vcmask 1047559
    %v1070 = vsel %vm1069, %v1056, %v1068
    %v1071 = vpack.c.b16 %v1070, %v1070
    %v1089 = vunpack.c.l.b16 %v1018
    %v1090 = vunpack.c.l.b16 %v1019
    %v1091 = vunpack.c.l.b16 %v1020
    %v1092 = vunpack.c.l.b16 %v1021
    %v1093 = vunpack.c.l.b16 %v1022
    %v1094 = vunpack.c.l.b16 %v1023
    %v1095 = vunpack.c.l.b16 %v1024
    %v1096 = vunpack.c.l.b16 %v1025
    %v1097 = vunpack.c.l.b16 %v1026
    %v1098 = vunpack.c.l.b16 %v1027
    %v1099 = vunpack.c.l.b16 %v1028
    %v1100 = vunpack.c.l.b16 %v1029
    %v1101 = vunpack.c.l.b16 %v1030
    %v1102 = vunpack.c.l.b16 %v1031
    %v1103 = vunpack.c.l.b16 %v1032
    %v1104 = vunpack.c.l.b16 %v1033
    %v1105 = vpack.c.b16 %v1090, %v1089
    %v1106 = vpack.c.b16 %v1092, %v1091
    %v1107 = vpack.c.b16 %v1094, %v1093
    %v1108 = vpack.c.b16 %v1096, %v1095
    %v1109 = vpack.c.b16 %v1098, %v1097
    %v1110 = vpack.c.b16 %v1100, %v1099
    %v1111 = vpack.c.b16 %v1102, %v1101
    %v1112 = vpack.c.b16 %v1104, %v1103
    %1121 = vmatprep.subr.bf16.mxu0 0
    %1122 = vmatpush1.bf16.msra.mxu0 %v1105
    %1123 = vmatprep.subr.bf16.mxu0 0
    %1124 = vmatpush1.bf16.msra.mxu0 %v1106
    %1125 = vmatprep.subr.bf16.mxu0 0
    %1126 = vmatpush1.bf16.msra.mxu0 %v1107
    %1127 = vmatprep.subr.bf16.mxu0 0
    %1128 = vmatpush1.bf16.msra.mxu0 %v1108
    %1129 = vmatprep.subr.bf16.mxu0 0
    %1130 = vmatpush1.bf16.msra.mxu0 %v1109
    %1131 = vmatprep.subr.bf16.mxu0 0
    %1132 = vmatpush1.bf16.msra.mxu0 %v1110
    %1133 = vmatprep.subr.bf16.mxu0 0
    %1134 = vmatpush1.bf16.msra.mxu0 %v1111
    %1135 = vmatprep.subr.bf16.mxu0 0
    %1136 = vmatpush1.bf16.msra.mxu0 %v1112
    %1137 = vmatprep.subr.bf16.mxu0 0
    %1138 = vmatpush1.bf16.msra.mxu0 0
    %1139 = vmatprep.subr.bf16.mxu0 0
    %1140 = vmatpush1.bf16.msra.mxu0 0
    %1141 = vmatprep.subr.bf16.mxu0 0
    %1142 = vmatpush1.bf16.msra.mxu0 0
    %1143 = vmatprep.subr.bf16.mxu0 0
    %1144 = vmatpush1.bf16.msra.mxu0 0
    %1145 = vmatprep.subr.bf16.mxu0 0
    %1146 = vmatpush1.bf16.msra.mxu0 0
    %1147 = vmatprep.subr.bf16.mxu0 0
    %1148 = vmatpush1.bf16.msra.mxu0 0
    %1149 = vmatprep.subr.bf16.mxu0 0
    %1150 = vmatpush1.bf16.msra.mxu0 0
    %1151 = vmatprep.subr.bf16.mxu0 0
    %1152 = vmatpush1.bf16.msra.mxu0 0
    %1153 = vmatprep.mubr.bf16.mxu0 0
    %1154 = vmatmul.mubr.bf16.gmra.mrb[0].mxu0 %v1071
    %v1155 = vpop.f32.mrb[0].mxu0
    %v1156 = vadd.f32 %v1039, %v1155
    %v1157 = vpop.f32.mrb[0].mxu0
    %v1158 = vpop.f32.mrb[0].mxu0
    %v1159 = vpop.f32.mrb[0].mxu0
    %1160 = vdwg.mxu0
    %1161 = vst [vmem:[#allocation11] sm:$0xff] %v1156
    // Predicated region
    $region42: #{tpu_custom_call.1} parent=1 // pred_check
      _
    $region43: #{tpu_custom_call.1} parent=1 // pred_check_branch
      %1163 = sbr.rel (0) target = $region45
    $region44: #{tpu_custom_call.1} parent=1 // pred_region
      %s1165 = ssub.s32 128, 128
      %1166 = vsyncadd [#allocation5], %s1165
      %s1168 = sshll.u32 [#allocation11], 4
      %s1169 = int_to_ptr.vmem [resolvable:$true] %s1168
      %1171 = dma.vmem_to_hbm [thread:$0]  %s1169, 128, %s6, [#allocation5]
    $region45: #{tpu_custom_call.1} parent=1 // pred_fallthru
      _
    // Predicated region
    $region46: #{tpu_custom_call.1} parent=1 // pred_check
      _
    $region47: #{tpu_custom_call.1} parent=1 // pred_check_branch
      %1173 = sbr.rel (0) target = $region49
    $region48: #{tpu_custom_call.1} parent=1 // pred_region
      %1174 = dma.done [#allocation5], 128
    $region49: #{tpu_custom_call.1} parent=1 // pred_fallthru
      _
    %1175 = vsyncpa [#allocation4], 1
    %1176 = vsyncpa [#allocation7], 1
    %1177 = vsyncpa [#allocation10], 1
    %1178 = vsyncpa [#allocation5], 1

</llo_original>
